<compile_context>
chip_gen: v7x
topology: tpu7x:2x2x1
jax: 0.10.0
libtpu: 0.0.40
codegen_flags: <defaults>
</compile_context>

<pallas_src>
import jax
import jax.numpy as jnp
import numpy as np
from jax.experimental import pallas as pl
from jax.experimental.pallas import tpu as pltpu

NEG_SLOPE = 0.01   # F.leaky_relu default negative_slope
MASK_VAL = -1e30   # finite large-negative; softmax path stays f32, so this
                   # never has to fit in bf16.


def _proj_kernel(h_ref, wext_ref, z_ref, scores_ref):
    """z_ext = h @ [W^T | W^T a_src^T | W^T a_dst^T]  (single fused MXU matmul)."""
    d = z_ref.shape[-1]
    z_ext = jnp.dot(h_ref[...], wext_ref[...], preferred_element_type=jnp.float32)
    z_ref[...] = z_ext[:, :d].astype(z_ref.dtype)   # z rows (bf16 for pass-2 MXU)
    scores_ref[...] = z_ext[:, d:d + 2]              # [:,0]=a_src.z_j  [:,1]=a_dst.z_i
    # TODO(synk): on v5e (128-wide MXU) the 130-wide output costs a second MXU
    # pass for 2 useful columns; compute the scores there as VPU lane
    # reductions sum(h * u, -1) with u = W^T a^T instead.


def _attn_kernel(sdst_ref, ssrc_ref, z_ref, adj_ref, o_ref, m_sc, l_sc):
    """Masked online softmax over src tiles; accumulate (unnormalized) into o_ref."""
    k = pl.program_id(1)
    tn = adj_ref.shape[-1]

    @pl.when(k == 0)
    def _init():
        m_sc[...] = jnp.full(m_sc.shape, MASK_VAL, dtype=m_sc.dtype)
        l_sc[...] = jnp.zeros_like(l_sc)
        o_ref[...] = jnp.zeros_like(o_ref)

    # edge logits e[r, c] = leaky_relu(s_dst[r] + s_src[c]) for edge c -> r
    mask = adj_ref[...] != 0                        # int8 compare, no f32 round-trip
    e = sdst_ref[...] + ssrc_ref[...]               # [tm,1]+[1,tn] -> [tm,tn]
    e = jnp.maximum(e, NEG_SLOPE * e)               # leaky_relu, 2 VPU ops
    e = jnp.where(mask, e, MASK_VAL)

    # online softmax update (running max / denominator); accumulate into o_ref,
    # which is VMEM-resident across the reduction axis (constant block index).
    m_prev = m_sc[...]
    m_new = jnp.maximum(m_prev, jnp.max(e, axis=-1, keepdims=True))
    corr = jnp.exp(m_prev - m_new)
    p = jnp.where(mask, jnp.exp(e - m_new), 0.0)    # keep zero-in-degree == NaN (ref parity)
    l_sc[...] = corr * l_sc[...] + jnp.sum(p, axis=-1, keepdims=True)

    src0 = pl.multiple_of(k * tn, tn)               # slice the resident z in VMEM
    z_blk = z_ref[pl.ds(src0, tn), :]
    o_ref[...] = corr * o_ref[...] + jnp.dot(
        p.astype(z_blk.dtype), z_blk, preferred_element_type=jnp.float32)
    m_sc[...] = m_new

    @pl.when(k == pl.num_programs(1) - 1)
    def _finalize():
        # Deferred normalization: one row scale instead of N*N divides; the
        # approx reciprocal lands in the (otherwise idle) EUP slot.
        o_ref[...] = o_ref[...] * pl.reciprocal(l_sc[...], approx=True)


def gat_forward(h, w_fc, w_attn, adj, *, mxu_dtype=jnp.bfloat16,
                block_dst=256, block_src=512, block_proj=1024,
                vmem_limit_bytes=48 * 1024 * 1024):
    """GAT forward.  adj[i, j] != 0 iff edge j -> i; int8 adjacency recommended.

    Tile defaults (dst 256, src 512) put the O(N^2) pass near the large-tile
    HBM roofline while keeping the VMEM working set (resident z + int8 adj tile
    + f32 output block + in-kernel temporaries) comfortably under v7x's 64 MiB;
    the dst axis is the leading "parallel" grid dimension (megacore) and the
    src axis is the trailing "arbitrary" reduction axis so the f32 output block
    doubles as the VMEM-resident accumulator.
    """
    n, in_dim = h.shape
    out_dim = w_fc.shape[0]
    assert w_fc.shape == (out_dim, in_dim)
    assert w_attn.shape == (1, 2 * out_dim)
    assert adj.shape == (n, n)

    # Fold the attention vectors into the fc matmul: a single MXU matmul
    # h @ [W^T | W^T a_src^T | W^T a_dst^T] yields z, s_src, s_dst at once.
    a_src = w_attn[:, :out_dim]          # applied to z of the edge *source*
    a_dst = w_attn[:, out_dim:]          # applied to z of the edge *destination*
    w_ext = jnp.concatenate(
        [w_fc.T, w_fc.T @ a_src.T, w_fc.T @ a_dst.T], axis=1)   # [in, out+2]

    h_c = h.astype(mxu_dtype)            # bf16 MXU inputs; softmax stays f32
    w_ext_c = w_ext.astype(mxu_dtype)

    # ---- tile selection ------------------------------------------------------
    tm = min(block_dst, n)               # dst tile (parallel / megacore axis)
    # keep >=2 dst tiles on the leading "parallel" axis so v7x's two TensorCores
    # both get work.
    if n // tm < 2 and n % 2 == 0 and (n // 2) % 8 == 0:
        tm = n // 2
    tn = min(block_src, n)               # src tile (reduction axis, last)
    tp = min(block_proj, n)              # pass-1 row tile
    assert n % tm == 0 and n % tn == 0 and n % tp == 0, \
        "N must be a multiple of the tile sizes"

    # ---- Pass 1: fused projection -------------------------------------------
    z, scores = pl.pallas_call(
        _proj_kernel,
        out_shape=(jax.ShapeDtypeStruct((n, out_dim), mxu_dtype),
                   jax.ShapeDtypeStruct((n, 2), jnp.float32)),
        grid=(n // tp,),
        in_specs=[pl.BlockSpec((tp, in_dim), lambda i: (i, 0)),
                  pl.BlockSpec((in_dim, out_dim + 2), lambda i: (0, 0))],
        out_specs=(pl.BlockSpec((tp, out_dim), lambda i: (i, 0)),
                   pl.BlockSpec((tp, 2), lambda i: (i, 0))),
        compiler_params=pltpu.CompilerParams(
            dimension_semantics=("parallel",),
            vmem_limit_bytes=vmem_limit_bytes),
    )(h_c, w_ext_c)

    s_dst = scores[:, 1:2]               # [N, 1] destination contribution
    s_src_row = scores[:, 0:1].T         # [1, N] lane-dense source contribution

    # ---- Pass 2: masked online-softmax attention + aggregation --------------
    # z is given a full-array BlockSpec with a constant block index, so it is
    # DMA'd into VMEM once and stays resident for the whole kernel (it is only
    # N*out_dim*2 bytes); adjacency is the only O(N^2) HBM stream.
    # TODO(synk): for genuinely sparse graphs, replace the dense int8 adjacency
    # with a PrefetchScalarGridSpec neighbor-offset gather of z rows.
    # TODO(synk): on v5e at very large N, bit-pack the adjacency (8 edges/byte)
    # and unpack with shifts/ands in-kernel to shrink the O(N^2) HBM stream.
    out = pl.pallas_call(
        _attn_kernel,
        out_shape=jax.ShapeDtypeStruct((n, out_dim), jnp.float32),
        grid=(n // tm, n // tn),   # (dst tiles: parallel, src tiles: reduction)
        in_specs=[pl.BlockSpec((tm, 1), lambda i, k: (i, 0)),            # s_dst
                  pl.BlockSpec((1, tn), lambda i, k: (0, k)),            # s_src row
                  pl.BlockSpec((n, out_dim), lambda i, k: (0, 0)),       # z, VMEM-resident
                  pl.BlockSpec((tm, tn), lambda i, k: (i, k))],          # adjacency
        out_specs=pl.BlockSpec((tm, out_dim), lambda i, k: (i, 0)),      # acc-resident
        scratch_shapes=[pltpu.VMEM((tm, 1), jnp.float32),                # running max
                        pltpu.VMEM((tm, 1), jnp.float32)],               # running denom
        compiler_params=pltpu.CompilerParams(
            dimension_semantics=("parallel", "arbitrary"),
            vmem_limit_bytes=vmem_limit_bytes),
    )(s_dst, s_src_row, z, adj)
    return out


def gat_reference(h, w_fc, w_attn, adj):
    """Pure-JAX f32 reference reproducing the PyTorch module exactly."""
    out_dim = w_fc.shape[0]
    z = h @ w_fc.T
    s_src = z @ w_attn[:, :out_dim].T          # [N, 1] source contribution
    s_dst = z @ w_attn[:, out_dim:].T          # [N, 1] destination contribution
    e = s_dst + s_src.T                        # e[i, j] for edge j -> i
    e = jnp.where(e > 0, e, NEG_SLOPE * e)
    e = jnp.where(adj != 0, e, -jnp.inf)
    alpha = jax.nn.softmax(e, axis=-1)
    return alpha @ z


if __name__ == "__main__":
    # Small but non-degenerate sizes: lane-dense out_dim (=128) and test-sized
    # tiles (128, 256) giving a (4, 2) pass-2 grid so both the megacore-parallel
    # dst axis and the multi-step online-softmax reduction are exercised.
    # (Production defaults are block_dst=256, block_src=512.)
    N, IN_DIM, OUT_DIM = 512, 64, 128

    key = jax.random.PRNGKey(0)
    k1, k2, k3, k4 = jax.random.split(key, 4)

    # node features h: [N, in_dim]
    h = jax.random.normal(k1, (N, IN_DIM), dtype=jnp.float32)
    # nn.Linear(in_dim, out_dim, bias=False): weight [out_dim, in_dim]
    w_fc = 0.1 * jax.random.normal(k2, (OUT_DIM, IN_DIM), dtype=jnp.float32)
    # nn.Linear(2*out_dim, 1, bias=False): weight [1, 2*out_dim]
    w_attn = 0.1 * jax.random.normal(k3, (1, 2 * OUT_DIM), dtype=jnp.float32)

    # Deterministic graph shipped as int8: random edges + ring + self-loops so
    # every node has >=1 incoming edge (a zero-in-degree row would give 0/0 =
    # NaN, matching softmax over an all-(-inf) row in the f32 reference).
    adj = jax.random.bernoulli(k4, 0.05, (N, N)).astype(jnp.int8)
    idx = jnp.arange(N)
    adj = adj.at[idx, idx].set(1)               # self-loops
    adj = adj.at[idx, (idx - 1) % N].set(1)     # ring edges (i-1) -> i

    out = gat_forward(h, w_fc, w_attn, adj, block_dst=128, block_src=256)
    out = jax.block_until_ready(out)
    ref = gat_reference(h, w_fc, w_attn, adj.astype(jnp.float32))

    out_np = np.asarray(out, dtype=np.float64)
    ref_np = np.asarray(ref, dtype=np.float64)
    assert out.shape == (N, OUT_DIM)
    assert np.all(np.isfinite(out_np))
    # Tolerances account for bf16 MXU inputs and the approximate reciprocal in
    # the deferred softmax normalization (reference is pure f32).
    rel_err = np.linalg.norm(out_np - ref_np) / np.linalg.norm(ref_np)
    max_err = np.max(np.abs(out_np - ref_np))
    assert rel_err < 2e-2, f"relative error too large: {rel_err}"
    assert max_err < 1e-1, f"max abs error too large: {max_err}"

    print("KERNEL_OK")
</pallas_src>

<mosaic_0001>
module attributes {stable_mosaic.version = 11 : i64} {
  func.func @_proj_kernel(%arg0: i32, %arg1: memref<512x64xbf16, #tpu.memory_space<vmem>>, %arg2: memref<64x130xbf16, #tpu.memory_space<vmem>>, %arg3: memref<512x128xbf16, #tpu.memory_space<vmem>>, %arg4: memref<512x2xf32, #tpu.memory_space<vmem>>) attributes {dimension_semantics = [#tpu.dimension_semantics<parallel>], iteration_bounds = array<i64: 1>, scalar_prefetch = 0 : i64, scratch_operands = 0 : i64, tpu.core_type = #tpu.core_type<tc>, window_params = [{transform_indices = @transform_0, window_bounds = array<i64: 512, 64>}, {pipeline_mode = #tpu.pipeline_mode<synchronous>, transform_indices = @transform_1, window_bounds = array<i64: 64, 130>}, {transform_indices = @transform_2, window_bounds = array<i64: 512, 128>}, {transform_indices = @transform_3, window_bounds = array<i64: 512, 2>}]} {
    %c0 = arith.constant 0 : index
    %c0_0 = arith.constant 0 : index
    %0 = vector.load %arg1[%c0, %c0_0] : memref<512x64xbf16, #tpu.memory_space<vmem>>, vector<512x64xbf16>
    %c0_1 = arith.constant 0 : index
    %c0_2 = arith.constant 0 : index
    %1 = vector.load %arg2[%c0_1, %c0_2] : memref<64x130xbf16, #tpu.memory_space<vmem>>, vector<64x130xbf16>
    %cst = arith.constant dense<0.000000e+00> : vector<512x130xf32>
    %2 = tpu.matmul %0, %1, %cst {dimension_numbers = #tpu.dot_dimension_numbers<[1], [0], [0], [1], [0, 0, 1, 1], [], []>} : vector<512x64xbf16>, vector<64x130xbf16>, vector<512x130xf32> -> vector<512x130xf32>
    %3 = vector.extract_strided_slice %2 {offsets = [0, 0], sizes = [512, 128], strides = [1, 1]} : vector<512x130xf32> to vector<512x128xf32>
    %4 = arith.truncf %3 : vector<512x128xf32> to vector<512x128xbf16>
    %c0_3 = arith.constant 0 : index
    %c0_4 = arith.constant 0 : index
    %5 = vector.load %arg3[%c0_3, %c0_4] : memref<512x128xbf16, #tpu.memory_space<vmem>>, vector<512x128xbf16>
    tpu.vector_store %arg3[%c0_3, %c0_4], %4 {strides = array<i32>} : memref<512x128xbf16, #tpu.memory_space<vmem>>, vector<512x128xbf16>,
    %6 = vector.extract_strided_slice %2 {offsets = [0, 128], sizes = [512, 2], strides = [1, 1]} : vector<512x130xf32> to vector<512x2xf32>
    %c0_5 = arith.constant 0 : index
    %c0_6 = arith.constant 0 : index
    %7 = vector.load %arg4[%c0_5, %c0_6] : memref<512x2xf32, #tpu.memory_space<vmem>>, vector<512x2xf32>
    tpu.vector_store %arg4[%c0_5, %c0_6], %6 {strides = array<i32>} : memref<512x2xf32, #tpu.memory_space<vmem>>, vector<512x2xf32>,
    return
  }
  func.func @transform_0(%arg0: i32) -> (i32, i32) {
    %c0_i32 = arith.constant 0 : i32
    %c0_i32_0 = arith.constant 0 : i32
    return %arg0, %c0_i32 : i32, i32
  }
  func.func @transform_1(%arg0: i32) -> (i32, i32) {
    %c0_i32 = arith.constant 0 : i32
    %c0_i32_0 = arith.constant 0 : i32
    %c0_i32_1 = arith.constant 0 : i32
    return %c0_i32, %c0_i32_0 : i32, i32
  }
  func.func @transform_2(%arg0: i32) -> (i32, i32) {
    %c0_i32 = arith.constant 0 : i32
    %c0_i32_0 = arith.constant 0 : i32
    return %arg0, %c0_i32 : i32, i32
  }
  func.func @transform_3(%arg0: i32) -> (i32, i32) {
    %c0_i32 = arith.constant 0 : i32
    %c0_i32_0 = arith.constant 0 : i32
    return %arg0, %c0_i32 : i32, i32
  }
}

</mosaic_0001>

<llo_original>
// kernel: tpu_custom_call.1
$region0: #{tpu_custom_call.1}
  #allocation0 [shape = 'u32[]', space=smem, size = 0x4, offset = 0x4, fixed_abs, tag = 'smem constant byte address 0x4 - core index']
  #allocation1 [shape = 'u32[144,128]{1,0:T(1,128)}', space=vmem, size = 0x12000, scoped, tag = 'internal scratch']
  %s0 = inlined_call_operand.vmem [shape: bf16[512,64], index: 0, kind: input, shape index: {}]
  %s1 = inlined_call_operand.vmem [shape: bf16[64,130], index: 1, kind: input, shape index: {}]
  %s2 = inlined_call_operand.hbm [shape: bf16[512,128], index: 2, kind: output, shape index: {0}]
  %s3 = inlined_call_operand.vmem [shape: f32[512,2], index: 3, kind: output, shape index: {1}]
  %4 = xla_tuple %s2, %s3
  %s5 = sld [smem:[#allocation0]]
  $region26: #{tpu_custom_call.1} parent=0
    _
  %s7 = ssub.s32 1, %s5
  %s8 = scalar_select 0, %s7, %s5
  $region1: #{tpu_custom_call.1} parent=0
    #allocation2 [shape = 'u8[131072]{0}', space=vmem, size = 0x20000, scoped, tag = 'output window, operand 0, single buffered']
    #allocation3 [shape = 's32[1]{0}', space=sflag, size = 0x4, scoped, tag = 'scoped memory for tpu_custom_call.1']
    %9 = vsyncpa [#allocation3], 0
    // Predicated region
    $region2: #{tpu_custom_call.1} parent=1 // pred_check
      _
    $region3: #{tpu_custom_call.1} parent=1 // pred_check_branch
      %11 = sbr.rel (0) target = $region5
    $region4: #{tpu_custom_call.1} parent=1 // pred_region
      _
    $region5: #{tpu_custom_call.1} parent=1 // pred_fallthru
      _
    // Predicated region
    $region6: #{tpu_custom_call.1} parent=1 // pred_check
      _
    $region7: #{tpu_custom_call.1} parent=1 // pred_check_branch
      %13 = sbr.rel (0) target = $region9
    $region8: #{tpu_custom_call.1} parent=1 // pred_region
      _
    $region9: #{tpu_custom_call.1} parent=1 // pred_fallthru
      _
    %v15 = vld [vmem:[%s0] sm:$0xf]
    %v16 = vld [vmem:[%s0 + $0x4] sm:$0xf]
    %v17 = vld [vmem:[%s0 + $0x8] sm:$0xf]
    %v18 = vld [vmem:[%s0 + $0xc] sm:$0xf]
    %v19 = vld [vmem:[%s0 + $0x10] sm:$0xf]
    %v20 = vld [vmem:[%s0 + $0x14] sm:$0xf]
    %v21 = vld [vmem:[%s0 + $0x18] sm:$0xf]
    %v22 = vld [vmem:[%s0 + $0x1c] sm:$0xf]
    %v23 = vld [vmem:[%s0 + $0x20] sm:$0xf]
    %v24 = vld [vmem:[%s0 + $0x24] sm:$0xf]
    %v25 = vld [vmem:[%s0 + $0x28] sm:$0xf]
    %v26 = vld [vmem:[%s0 + $0x2c] sm:$0xf]
    %v27 = vld [vmem:[%s0 + $0x30] sm:$0xf]
    %v28 = vld [vmem:[%s0 + $0x34] sm:$0xf]
    %v29 = vld [vmem:[%s0 + $0x38] sm:$0xf]
    %v30 = vld [vmem:[%s0 + $0x3c] sm:$0xf]
    %v31 = vld [vmem:[%s0 + $0x40] sm:$0xf]
    %v32 = vld [vmem:[%s0 + $0x44] sm:$0xf]
    %v33 = vld [vmem:[%s0 + $0x48] sm:$0xf]
    %v34 = vld [vmem:[%s0 + $0x4c] sm:$0xf]
    %v35 = vld [vmem:[%s0 + $0x50] sm:$0xf]
    %v36 = vld [vmem:[%s0 + $0x54] sm:$0xf]
    %v37 = vld [vmem:[%s0 + $0x58] sm:$0xf]
    %v38 = vld [vmem:[%s0 + $0x5c] sm:$0xf]
    %v39 = vld [vmem:[%s0 + $0x60] sm:$0xf]
    %v40 = vld [vmem:[%s0 + $0x64] sm:$0xf]
    %v41 = vld [vmem:[%s0 + $0x68] sm:$0xf]
    %v42 = vld [vmem:[%s0 + $0x6c] sm:$0xf]
    %v43 = vld [vmem:[%s0 + $0x70] sm:$0xf]
    %v44 = vld [vmem:[%s0 + $0x74] sm:$0xf]
    %v45 = vld [vmem:[%s0 + $0x78] sm:$0xf]
    %v46 = vld [vmem:[%s0 + $0x7c] sm:$0xf]
    %v47 = vld [vmem:[%s0 + $0x80] sm:$0xf]
    %v48 = vld [vmem:[%s0 + $0x84] sm:$0xf]
    %v49 = vld [vmem:[%s0 + $0x88] sm:$0xf]
    %v50 = vld [vmem:[%s0 + $0x8c] sm:$0xf]
    %v51 = vld [vmem:[%s0 + $0x90] sm:$0xf]
    %v52 = vld [vmem:[%s0 + $0x94] sm:$0xf]
    %v53 = vld [vmem:[%s0 + $0x98] sm:$0xf]
    %v54 = vld [vmem:[%s0 + $0x9c] sm:$0xf]
    %v55 = vld [vmem:[%s0 + $0xa0] sm:$0xf]
    %v56 = vld [vmem:[%s0 + $0xa4] sm:$0xf]
    %v57 = vld [vmem:[%s0 + $0xa8] sm:$0xf]
    %v58 = vld [vmem:[%s0 + $0xac] sm:$0xf]
    %v59 = vld [vmem:[%s0 + $0xb0] sm:$0xf]
    %v60 = vld [vmem:[%s0 + $0xb4] sm:$0xf]
    %v61 = vld [vmem:[%s0 + $0xb8] sm:$0xf]
    %v62 = vld [vmem:[%s0 + $0xbc] sm:$0xf]
    %v63 = vld [vmem:[%s0 + $0xc0] sm:$0xf]
    %v64 = vld [vmem:[%s0 + $0xc4] sm:$0xf]
    %v65 = vld [vmem:[%s0 + $0xc8] sm:$0xf]
    %v66 = vld [vmem:[%s0 + $0xcc] sm:$0xf]
    %v67 = vld [vmem:[%s0 + $0xd0] sm:$0xf]
    %v68 = vld [vmem:[%s0 + $0xd4] sm:$0xf]
    %v69 = vld [vmem:[%s0 + $0xd8] sm:$0xf]
    %v70 = vld [vmem:[%s0 + $0xdc] sm:$0xf]
    %v71 = vld [vmem:[%s0 + $0xe0] sm:$0xf]
    %v72 = vld [vmem:[%s0 + $0xe4] sm:$0xf]
    %v73 = vld [vmem:[%s0 + $0xe8] sm:$0xf]
    %v74 = vld [vmem:[%s0 + $0xec] sm:$0xf]
    %v75 = vld [vmem:[%s0 + $0xf0] sm:$0xf]
    %v76 = vld [vmem:[%s0 + $0xf4] sm:$0xf]
    %v77 = vld [vmem:[%s0 + $0xf8] sm:$0xf]
    %v78 = vld [vmem:[%s0 + $0xfc] sm:$0xf]
    %v79 = vld [vmem:[%s1] sm:$0xff]
    %v80 = vld [vmem:[%s1 + $0x8] sm:$0xff]
    %v81 = vld [vmem:[%s1 + $0x10] sm:$0xff]
    %v82 = vld [vmem:[%s1 + $0x18] sm:$0xff]
    %v83 = vld [vmem:[%s1 + $0x20] sm:$0xff]
    %v84 = vld [vmem:[%s1 + $0x28] sm:$0xff]
    %v85 = vld [vmem:[%s1 + $0x30] sm:$0xff]
    %v86 = vld [vmem:[%s1 + $0x38] sm:$0xff]
    %v151 = vunpack.c.l.b16 %v15
    %v152 = vunpack.c.l.b16 %v16
    %v153 = vunpack.c.l.b16 %v17
    %v154 = vunpack.c.l.b16 %v18
    %v155 = vunpack.c.l.b16 %v19
    %v156 = vunpack.c.l.b16 %v20
    %v157 = vunpack.c.l.b16 %v21
    %v158 = vunpack.c.l.b16 %v22
    %v159 = vunpack.c.l.b16 %v23
    %v160 = vunpack.c.l.b16 %v24
    %v161 = vunpack.c.l.b16 %v25
    %v162 = vunpack.c.l.b16 %v26
    %v163 = vunpack.c.l.b16 %v27
    %v164 = vunpack.c.l.b16 %v28
    %v165 = vunpack.c.l.b16 %v29
    %v166 = vunpack.c.l.b16 %v30
    %v167 = vunpack.c.l.b16 %v31
    %v168 = vunpack.c.l.b16 %v32
    %v169 = vunpack.c.l.b16 %v33
    %v170 = vunpack.c.l.b16 %v34
    %v171 = vunpack.c.l.b16 %v35
    %v172 = vunpack.c.l.b16 %v36
    %v173 = vunpack.c.l.b16 %v37
    %v174 = vunpack.c.l.b16 %v38
    %v175 = vunpack.c.l.b16 %v39
    %v176 = vunpack.c.l.b16 %v40
    %v177 = vunpack.c.l.b16 %v41
    %v178 = vunpack.c.l.b16 %v42
    %v179 = vunpack.c.l.b16 %v43
    %v180 = vunpack.c.l.b16 %v44
    %v181 = vunpack.c.l.b16 %v45
    %v182 = vunpack.c.l.b16 %v46
    %v183 = vunpack.c.l.b16 %v47
    %v184 = vunpack.c.l.b16 %v48
    %v185 = vunpack.c.l.b16 %v49
    %v186 = vunpack.c.l.b16 %v50
    %v187 = vunpack.c.l.b16 %v51
    %v188 = vunpack.c.l.b16 %v52
    %v189 = vunpack.c.l.b16 %v53
    %v190 = vunpack.c.l.b16 %v54
    %v191 = vunpack.c.l.b16 %v55
    %v192 = vunpack.c.l.b16 %v56
    %v193 = vunpack.c.l.b16 %v57
    %v194 = vunpack.c.l.b16 %v58
    %v195 = vunpack.c.l.b16 %v59
    %v196 = vunpack.c.l.b16 %v60
    %v197 = vunpack.c.l.b16 %v61
    %v198 = vunpack.c.l.b16 %v62
    %v199 = vunpack.c.l.b16 %v63
    %v200 = vunpack.c.l.b16 %v64
    %v201 = vunpack.c.l.b16 %v65
    %v202 = vunpack.c.l.b16 %v66
    %v203 = vunpack.c.l.b16 %v67
    %v204 = vunpack.c.l.b16 %v68
    %v205 = vunpack.c.l.b16 %v69
    %v206 = vunpack.c.l.b16 %v70
    %v207 = vunpack.c.l.b16 %v71
    %v208 = vunpack.c.l.b16 %v72
    %v209 = vunpack.c.l.b16 %v73
    %v210 = vunpack.c.l.b16 %v74
    %v211 = vunpack.c.l.b16 %v75
    %v212 = vunpack.c.l.b16 %v76
    %v213 = vunpack.c.l.b16 %v77
    %v214 = vunpack.c.l.b16 %v78
    %v215 = vpack.c.b16 %v152, %v151
    %v216 = vpack.c.b16 %v154, %v153
    %v217 = vpack.c.b16 %v156, %v155
    %v218 = vpack.c.b16 %v158, %v157
    %v219 = vpack.c.b16 %v160, %v159
    %v220 = vpack.c.b16 %v162, %v161
    %v221 = vpack.c.b16 %v164, %v163
    %v222 = vpack.c.b16 %v166, %v165
    %v223 = vpack.c.b16 %v168, %v167
    %v224 = vpack.c.b16 %v170, %v169
    %v225 = vpack.c.b16 %v172, %v171
    %v226 = vpack.c.b16 %v174, %v173
    %v227 = vpack.c.b16 %v176, %v175
    %v228 = vpack.c.b16 %v178, %v177
    %v229 = vpack.c.b16 %v180, %v179
    %v230 = vpack.c.b16 %v182, %v181
    %v231 = vpack.c.b16 %v184, %v183
    %v232 = vpack.c.b16 %v186, %v185
    %v233 = vpack.c.b16 %v188, %v187
    %v234 = vpack.c.b16 %v190, %v189
    %v235 = vpack.c.b16 %v192, %v191
    %v236 = vpack.c.b16 %v194, %v193
    %v237 = vpack.c.b16 %v196, %v195
    %v238 = vpack.c.b16 %v198, %v197
    %v239 = vpack.c.b16 %v200, %v199
    %v240 = vpack.c.b16 %v202, %v201
    %v241 = vpack.c.b16 %v204, %v203
    %v242 = vpack.c.b16 %v206, %v205
    %v243 = vpack.c.b16 %v208, %v207
    %v244 = vpack.c.b16 %v210, %v209
    %v245 = vpack.c.b16 %v212, %v211
    %v246 = vpack.c.b16 %v214, %v213
    %v255 = vunpack.c.l.b16 %v79
    %v256 = vunpack.c.h.b16 %v79
    %v257 = vunpack.c.l.b16 %v80
    %v258 = vunpack.c.h.b16 %v80
    %v259 = vunpack.c.l.b16 %v81
    %v260 = vunpack.c.h.b16 %v81
    %v261 = vunpack.c.l.b16 %v82
    %v262 = vunpack.c.h.b16 %v82
    %v263 = vunpack.c.l.b16 %v83
    %v264 = vunpack.c.h.b16 %v83
    %v265 = vunpack.c.l.b16 %v84
    %v266 = vunpack.c.h.b16 %v84
    %v267 = vunpack.c.l.b16 %v85
    %v268 = vunpack.c.h.b16 %v85
    %v269 = vunpack.c.l.b16 %v86
    %v270 = vunpack.c.h.b16 %v86
    %v271 = vpack.c.b16 %v257, %v255
    %v272 = vpack.c.b16 %v258, %v256
    %v273 = vpack.c.b16 %v261, %v259
    %v274 = vpack.c.b16 %v262, %v260
    %v275 = vpack.c.b16 %v265, %v263
    %v276 = vpack.c.b16 %v266, %v264
    %v277 = vpack.c.b16 %v269, %v267
    %v278 = vpack.c.b16 %v270, %v268
    %vm287 = vcmask 523264
    %v289 = vsel %vm287, %v215, 0
    %v292 = vsel %vm287, %v216, 0
    %v295 = vsel %vm287, %v217, 0
    %v298 = vsel %vm287, %v218, 0
    %v301 = vsel %vm287, %v219, 0
    %v304 = vsel %vm287, %v220, 0
    %v307 = vsel %vm287, %v221, 0
    %v310 = vsel %vm287, %v222, 0
    %v313 = vsel %vm287, %v223, 0
    %v316 = vsel %vm287, %v224, 0
    %v319 = vsel %vm287, %v225, 0
    %v322 = vsel %vm287, %v226, 0
    %v325 = vsel %vm287, %v227, 0
    %v328 = vsel %vm287, %v228, 0
    %v331 = vsel %vm287, %v229, 0
    %v334 = vsel %vm287, %v230, 0
    %v337 = vsel %vm287, %v231, 0
    %v340 = vsel %vm287, %v232, 0
    %v343 = vsel %vm287, %v233, 0
    %v346 = vsel %vm287, %v234, 0
    %v349 = vsel %vm287, %v235, 0
    %v352 = vsel %vm287, %v236, 0
    %v355 = vsel %vm287, %v237, 0
    %v358 = vsel %vm287, %v238, 0
    %v361 = vsel %vm287, %v239, 0
    %v364 = vsel %vm287, %v240, 0
    %v367 = vsel %vm287, %v241, 0
    %v370 = vsel %vm287, %v242, 0
    %v373 = vsel %vm287, %v243, 0
    %v376 = vsel %vm287, %v244, 0
    %v379 = vsel %vm287, %v245, 0
    %v382 = vsel %vm287, %v246, 0
    %384 = vmatprep.subr.bf16.mxu0 %v272
    %385 = vmatpush1.bf16.msra.mxu0 %v271
    %386 = vmatprep.subr.bf16.mxu0 %v274
    %387 = vmatpush1.bf16.msra.mxu0 %v273
    %388 = vmatprep.subr.bf16.mxu0 %v276
    %389 = vmatpush1.bf16.msra.mxu0 %v275
    %390 = vmatprep.subr.bf16.mxu0 %v278
    %391 = vmatpush1.bf16.msra.mxu0 %v277
    %392 = vmatprep.subr.bf16.mxu0 0
    %393 = vmatpush1.bf16.msra.mxu0 0
    %394 = vmatprep.subr.bf16.mxu0 0
    %395 = vmatpush1.bf16.msra.mxu0 0
    %396 = vmatprep.subr.bf16.mxu0 0
    %397 = vmatpush1.bf16.msra.mxu0 0
    %398 = vmatprep.subr.bf16.mxu0 0
    %399 = vmatpush1.bf16.msra.mxu0 0
    %400 = vmatprep.subr.bf16.mxu0 0
    %401 = vmatpush1.bf16.msra.mxu0 0
    %402 = vmatprep.subr.bf16.mxu0 0
    %403 = vmatpush1.bf16.msra.mxu0 0
    %404 = vmatprep.subr.bf16.mxu0 0
    %405 = vmatpush1.bf16.msra.mxu0 0
    %406 = vmatprep.subr.bf16.mxu0 0
    %407 = vmatpush1.bf16.msra.mxu0 0
    %408 = vmatprep.subr.bf16.mxu0 0
    %409 = vmatpush1.bf16.msra.mxu0 0
    %410 = vmatprep.subr.bf16.mxu0 0
    %411 = vmatpush1.bf16.msra.mxu0 0
    %412 = vmatprep.subr.bf16.mxu0 0
    %413 = vmatpush1.bf16.msra.mxu0 0
    %414 = vmatprep.subr.bf16.mxu0 0
    %415 = vmatpush1.bf16.msra.mxu0 0
    %416 = vmatprep.mubr.bf16.mxu0 0
    %417 = vmatmul.mubr.bf16.gmra.mrb[0].mxu0 %v289
    %v418 = vpop.f32.mrb[0].mxu0
    %v419 = vadd.f32 0.0, %v418
    %v420 = vpop.f32.mrb[0].mxu0
    %v421 = vadd.f32 0.0, %v420
    %v422 = vpop.f32.mrb[0].mxu0
    %v423 = vadd.f32 0.0, %v422
    %v424 = vpop.f32.mrb[0].mxu0
    %v425 = vadd.f32 0.0, %v424
    %426 = vmatprep.mubr.bf16.mxu0 0
    %427 = vmatmul.mubr.bf16.gmra.mrb[0].mxu0 %v292
    %v428 = vpop.f32.mrb[0].mxu0
    %v429 = vadd.f32 0.0, %v428
    %v430 = vpop.f32.mrb[0].mxu0
    %v431 = vadd.f32 0.0, %v430
    %v432 = vpop.f32.mrb[0].mxu0
    %v433 = vadd.f32 0.0, %v432
    %v434 = vpop.f32.mrb[0].mxu0
    %v435 = vadd.f32 0.0, %v434
    %436 = vmatprep.mubr.bf16.mxu0 0
    %437 = vmatmul.mubr.bf16.gmra.mrb[0].mxu0 %v295
    %v438 = vpop.f32.mrb[0].mxu0
    %v439 = vadd.f32 0.0, %v438
    %v440 = vpop.f32.mrb[0].mxu0
    %v441 = vadd.f32 0.0, %v440
    %v442 = vpop.f32.mrb[0].mxu0
    %v443 = vadd.f32 0.0, %v442
    %v444 = vpop.f32.mrb[0].mxu0
    %v445 = vadd.f32 0.0, %v444
    %446 = vmatprep.mubr.bf16.mxu0 0
    %447 = vmatmul.mubr.bf16.gmra.mrb[0].mxu0 %v298
    %v448 = vpop.f32.mrb[0].mxu0
    %v449 = vadd.f32 0.0, %v448
    %v450 = vpop.f32.mrb[0].mxu0
    %v451 = vadd.f32 0.0, %v450
    %v452 = vpop.f32.mrb[0].mxu0
    %v453 = vadd.f32 0.0, %v452
    %v454 = vpop.f32.mrb[0].mxu0
    %v455 = vadd.f32 0.0, %v454
    %456 = vmatprep.mubr.bf16.mxu0 0
    %457 = vmatmul.mubr.bf16.gmra.mrb[0].mxu0 %v301
    %v458 = vpop.f32.mrb[0].mxu0
    %v459 = vadd.f32 0.0, %v458
    %v460 = vpop.f32.mrb[0].mxu0
    %v461 = vadd.f32 0.0, %v460
    %v462 = vpop.f32.mrb[0].mxu0
    %v463 = vadd.f32 0.0, %v462
    %v464 = vpop.f32.mrb[0].mxu0
    %v465 = vadd.f32 0.0, %v464
    %466 = vmatprep.mubr.bf16.mxu0 0
    %467 = vmatmul.mubr.bf16.gmra.mrb[0].mxu0 %v304
    %v468 = vpop.f32.mrb[0].mxu0
    %v469 = vadd.f32 0.0, %v468
    %v470 = vpop.f32.mrb[0].mxu0
    %v471 = vadd.f32 0.0, %v470
    %v472 = vpop.f32.mrb[0].mxu0
    %v473 = vadd.f32 0.0, %v472
    %v474 = vpop.f32.mrb[0].mxu0
    %v475 = vadd.f32 0.0, %v474
    %476 = vmatprep.mubr.bf16.mxu0 0
    %477 = vmatmul.mubr.bf16.gmra.mrb[0].mxu0 %v307
    %v478 = vpop.f32.mrb[0].mxu0
    %v479 = vadd.f32 0.0, %v478
    %v480 = vpop.f32.mrb[0].mxu0
    %v481 = vadd.f32 0.0, %v480
    %v482 = vpop.f32.mrb[0].mxu0
    %v483 = vadd.f32 0.0, %v482
    %v484 = vpop.f32.mrb[0].mxu0
    %v485 = vadd.f32 0.0, %v484
    %486 = vmatprep.mubr.bf16.mxu0 0
    %487 = vmatmul.mubr.bf16.gmra.mrb[0].mxu0 %v310
    %v488 = vpop.f32.mrb[0].mxu0
    %v489 = vadd.f32 0.0, %v488
    %v490 = vpop.f32.mrb[0].mxu0
    %v491 = vadd.f32 0.0, %v490
    %v492 = vpop.f32.mrb[0].mxu0
    %v493 = vadd.f32 0.0, %v492
    %v494 = vpop.f32.mrb[0].mxu0
    %v495 = vadd.f32 0.0, %v494
    %496 = vmatprep.mubr.bf16.mxu0 0
    %497 = vmatmul.mubr.bf16.gmra.mrb[0].mxu0 %v313
    %v498 = vpop.f32.mrb[0].mxu0
    %v499 = vadd.f32 0.0, %v498
    %v500 = vpop.f32.mrb[0].mxu0
    %v501 = vadd.f32 0.0, %v500
    %v502 = vpop.f32.mrb[0].mxu0
    %v503 = vadd.f32 0.0, %v502
    %v504 = vpop.f32.mrb[0].mxu0
    %v505 = vadd.f32 0.0, %v504
    %506 = vmatprep.mubr.bf16.mxu0 0
    %507 = vmatmul.mubr.bf16.gmra.mrb[0].mxu0 %v316
    %v508 = vpop.f32.mrb[0].mxu0
    %v509 = vadd.f32 0.0, %v508
    %v510 = vpop.f32.mrb[0].mxu0
    %v511 = vadd.f32 0.0, %v510
    %v512 = vpop.f32.mrb[0].mxu0
    %v513 = vadd.f32 0.0, %v512
    %v514 = vpop.f32.mrb[0].mxu0
    %v515 = vadd.f32 0.0, %v514
    %516 = vmatprep.mubr.bf16.mxu0 0
    %517 = vmatmul.mubr.bf16.gmra.mrb[0].mxu0 %v319
    %v518 = vpop.f32.mrb[0].mxu0
    %v519 = vadd.f32 0.0, %v518
    %v520 = vpop.f32.mrb[0].mxu0
    %v521 = vadd.f32 0.0, %v520
    %v522 = vpop.f32.mrb[0].mxu0
    %v523 = vadd.f32 0.0, %v522
    %v524 = vpop.f32.mrb[0].mxu0
    %v525 = vadd.f32 0.0, %v524
    %526 = vmatprep.mubr.bf16.mxu0 0
    %527 = vmatmul.mubr.bf16.gmra.mrb[0].mxu0 %v322
    %v528 = vpop.f32.mrb[0].mxu0
    %v529 = vadd.f32 0.0, %v528
    %v530 = vpop.f32.mrb[0].mxu0
    %v531 = vadd.f32 0.0, %v530
    %v532 = vpop.f32.mrb[0].mxu0
    %v533 = vadd.f32 0.0, %v532
    %v534 = vpop.f32.mrb[0].mxu0
    %v535 = vadd.f32 0.0, %v534
    %536 = vmatprep.mubr.bf16.mxu0 0
    %537 = vmatmul.mubr.bf16.gmra.mrb[0].mxu0 %v325
    %v538 = vpop.f32.mrb[0].mxu0
    %v539 = vadd.f32 0.0, %v538
    %v540 = vpop.f32.mrb[0].mxu0
    %v541 = vadd.f32 0.0, %v540
    %v542 = vpop.f32.mrb[0].mxu0
    %v543 = vadd.f32 0.0, %v542
    %v544 = vpop.f32.mrb[0].mxu0
    %v545 = vadd.f32 0.0, %v544
    %546 = vmatprep.mubr.bf16.mxu0 0
    %547 = vmatmul.mubr.bf16.gmra.mrb[0].mxu0 %v328
    %v548 = vpop.f32.mrb[0].mxu0
    %v549 = vadd.f32 0.0, %v548
    %v550 = vpop.f32.mrb[0].mxu0
    %v551 = vadd.f32 0.0, %v550
    %v552 = vpop.f32.mrb[0].mxu0
    %v553 = vadd.f32 0.0, %v552
    %v554 = vpop.f32.mrb[0].mxu0
    %v555 = vadd.f32 0.0, %v554
    %556 = vmatprep.mubr.bf16.mxu0 0
    %557 = vmatmul.mubr.bf16.gmra.mrb[0].mxu0 %v331
    %v558 = vpop.f32.mrb[0].mxu0
    %v559 = vadd.f32 0.0, %v558
    %v560 = vpop.f32.mrb[0].mxu0
    %v561 = vadd.f32 0.0, %v560
    %v562 = vpop.f32.mrb[0].mxu0
    %v563 = vadd.f32 0.0, %v562
    %v564 = vpop.f32.mrb[0].mxu0
    %v565 = vadd.f32 0.0, %v564
    %566 = vmatprep.mubr.bf16.mxu0 0
    %567 = vmatmul.mubr.bf16.gmra.mrb[0].mxu0 %v334
    %v568 = vpop.f32.mrb[0].mxu0
    %v569 = vadd.f32 0.0, %v568
    %v570 = vpop.f32.mrb[0].mxu0
    %v571 = vadd.f32 0.0, %v570
    %v572 = vpop.f32.mrb[0].mxu0
    %v573 = vadd.f32 0.0, %v572
    %v574 = vpop.f32.mrb[0].mxu0
    %v575 = vadd.f32 0.0, %v574
    %576 = vmatprep.mubr.bf16.mxu0 0
    %577 = vmatmul.mubr.bf16.gmra.mrb[0].mxu0 %v337
    %v578 = vpop.f32.mrb[0].mxu0
    %v579 = vadd.f32 0.0, %v578
    %v580 = vpop.f32.mrb[0].mxu0
    %v581 = vadd.f32 0.0, %v580
    %v582 = vpop.f32.mrb[0].mxu0
    %v583 = vadd.f32 0.0, %v582
    %v584 = vpop.f32.mrb[0].mxu0
    %v585 = vadd.f32 0.0, %v584
    %586 = vmatprep.mubr.bf16.mxu0 0
    %587 = vmatmul.mubr.bf16.gmra.mrb[0].mxu0 %v340
    %v588 = vpop.f32.mrb[0].mxu0
    %v589 = vadd.f32 0.0, %v588
    %v590 = vpop.f32.mrb[0].mxu0
    %v591 = vadd.f32 0.0, %v590
    %v592 = vpop.f32.mrb[0].mxu0
    %v593 = vadd.f32 0.0, %v592
    %v594 = vpop.f32.mrb[0].mxu0
    %v595 = vadd.f32 0.0, %v594
    %596 = vmatprep.mubr.bf16.mxu0 0
    %597 = vmatmul.mubr.bf16.gmra.mrb[0].mxu0 %v343
    %v598 = vpop.f32.mrb[0].mxu0
    %v599 = vadd.f32 0.0, %v598
    %v600 = vpop.f32.mrb[0].mxu0
    %v601 = vadd.f32 0.0, %v600
    %v602 = vpop.f32.mrb[0].mxu0
    %v603 = vadd.f32 0.0, %v602
    %v604 = vpop.f32.mrb[0].mxu0
    %v605 = vadd.f32 0.0, %v604
    %606 = vmatprep.mubr.bf16.mxu0 0
    %607 = vmatmul.mubr.bf16.gmra.mrb[0].mxu0 %v346
    %v608 = vpop.f32.mrb[0].mxu0
    %v609 = vadd.f32 0.0, %v608
    %v610 = vpop.f32.mrb[0].mxu0
    %v611 = vadd.f32 0.0, %v610
    %v612 = vpop.f32.mrb[0].mxu0
    %v613 = vadd.f32 0.0, %v612
    %v614 = vpop.f32.mrb[0].mxu0
    %v615 = vadd.f32 0.0, %v614
    %616 = vmatprep.mubr.bf16.mxu0 0
    %617 = vmatmul.mubr.bf16.gmra.mrb[0].mxu0 %v349
    %v618 = vpop.f32.mrb[0].mxu0
    %v619 = vadd.f32 0.0, %v618
    %v620 = vpop.f32.mrb[0].mxu0
    %v621 = vadd.f32 0.0, %v620
    %v622 = vpop.f32.mrb[0].mxu0
    %v623 = vadd.f32 0.0, %v622
    %v624 = vpop.f32.mrb[0].mxu0
    %v625 = vadd.f32 0.0, %v624
    %626 = vmatprep.mubr.bf16.mxu0 0
    %627 = vmatmul.mubr.bf16.gmra.mrb[0].mxu0 %v352
    %v628 = vpop.f32.mrb[0].mxu0
    %v629 = vadd.f32 0.0, %v628
    %v630 = vpop.f32.mrb[0].mxu0
    %v631 = vadd.f32 0.0, %v630
    %v632 = vpop.f32.mrb[0].mxu0
    %v633 = vadd.f32 0.0, %v632
    %v634 = vpop.f32.mrb[0].mxu0
    %v635 = vadd.f32 0.0, %v634
    %636 = vmatprep.mubr.bf16.mxu0 0
    %637 = vmatmul.mubr.bf16.gmra.mrb[0].mxu0 %v355
    %v638 = vpop.f32.mrb[0].mxu0
    %v639 = vadd.f32 0.0, %v638
    %v640 = vpop.f32.mrb[0].mxu0
    %v641 = vadd.f32 0.0, %v640
    %v642 = vpop.f32.mrb[0].mxu0
    %v643 = vadd.f32 0.0, %v642
    %v644 = vpop.f32.mrb[0].mxu0
    %v645 = vadd.f32 0.0, %v644
    %646 = vmatprep.mubr.bf16.mxu0 0
    %647 = vmatmul.mubr.bf16.gmra.mrb[0].mxu0 %v358
    %v648 = vpop.f32.mrb[0].mxu0
    %v649 = vadd.f32 0.0, %v648
    %v650 = vpop.f32.mrb[0].mxu0
    %v651 = vadd.f32 0.0, %v650
    %v652 = vpop.f32.mrb[0].mxu0
    %v653 = vadd.f32 0.0, %v652
    %v654 = vpop.f32.mrb[0].mxu0
    %v655 = vadd.f32 0.0, %v654
    %656 = vmatprep.mubr.bf16.mxu0 0
    %657 = vmatmul.mubr.bf16.gmra.mrb[0].mxu0 %v361
    %v658 = vpop.f32.mrb[0].mxu0
    %v659 = vadd.f32 0.0, %v658
    %v660 = vpop.f32.mrb[0].mxu0
    %v661 = vadd.f32 0.0, %v660
    %v662 = vpop.f32.mrb[0].mxu0
    %v663 = vadd.f32 0.0, %v662
    %v664 = vpop.f32.mrb[0].mxu0
    %v665 = vadd.f32 0.0, %v664
    %666 = vmatprep.mubr.bf16.mxu0 0
    %667 = vmatmul.mubr.bf16.gmra.mrb[0].mxu0 %v364
    %v668 = vpop.f32.mrb[0].mxu0
    %v669 = vadd.f32 0.0, %v668
    %v670 = vpop.f32.mrb[0].mxu0
    %v671 = vadd.f32 0.0, %v670
    %v672 = vpop.f32.mrb[0].mxu0
    %v673 = vadd.f32 0.0, %v672
    %v674 = vpop.f32.mrb[0].mxu0
    %v675 = vadd.f32 0.0, %v674
    %676 = vmatprep.mubr.bf16.mxu0 0
    %677 = vmatmul.mubr.bf16.gmra.mrb[0].mxu0 %v367
    %v678 = vpop.f32.mrb[0].mxu0
    %v679 = vadd.f32 0.0, %v678
    %v680 = vpop.f32.mrb[0].mxu0
    %v681 = vadd.f32 0.0, %v680
    %v682 = vpop.f32.mrb[0].mxu0
    %v683 = vadd.f32 0.0, %v682
    %v684 = vpop.f32.mrb[0].mxu0
    %v685 = vadd.f32 0.0, %v684
    %686 = vmatprep.mubr.bf16.mxu0 0
    %687 = vmatmul.mubr.bf16.gmra.mrb[0].mxu0 %v370
    %v688 = vpop.f32.mrb[0].mxu0
    %v689 = vadd.f32 0.0, %v688
    %v690 = vpop.f32.mrb[0].mxu0
    %v691 = vadd.f32 0.0, %v690
    %v692 = vpop.f32.mrb[0].mxu0
    %v693 = vadd.f32 0.0, %v692
    %v694 = vpop.f32.mrb[0].mxu0
    %v695 = vadd.f32 0.0, %v694
    %696 = vmatprep.mubr.bf16.mxu0 0
    %697 = vmatmul.mubr.bf16.gmra.mrb[0].mxu0 %v373
    %v698 = vpop.f32.mrb[0].mxu0
    %v699 = vadd.f32 0.0, %v698
    %v700 = vpop.f32.mrb[0].mxu0
    %v701 = vadd.f32 0.0, %v700
    %v702 = vpop.f32.mrb[0].mxu0
    %v703 = vadd.f32 0.0, %v702
    %v704 = vpop.f32.mrb[0].mxu0
    %v705 = vadd.f32 0.0, %v704
    %706 = vmatprep.mubr.bf16.mxu0 0
    %707 = vmatmul.mubr.bf16.gmra.mrb[0].mxu0 %v376
    %v708 = vpop.f32.mrb[0].mxu0
    %v709 = vadd.f32 0.0, %v708
    %v710 = vpop.f32.mrb[0].mxu0
    %v711 = vadd.f32 0.0, %v710
    %v712 = vpop.f32.mrb[0].mxu0
    %v713 = vadd.f32 0.0, %v712
    %v714 = vpop.f32.mrb[0].mxu0
    %v715 = vadd.f32 0.0, %v714
    %716 = vmatprep.mubr.bf16.mxu0 0
    %717 = vmatmul.mubr.bf16.gmra.mrb[0].mxu0 %v379
    %v718 = vpop.f32.mrb[0].mxu0
    %v719 = vadd.f32 0.0, %v718
    %v720 = vpop.f32.mrb[0].mxu0
    %v721 = vadd.f32 0.0, %v720
    %v722 = vpop.f32.mrb[0].mxu0
    %v723 = vadd.f32 0.0, %v722
    %v724 = vpop.f32.mrb[0].mxu0
    %v725 = vadd.f32 0.0, %v724
    %726 = vmatprep.mubr.bf16.mxu0 0
    %727 = vmatmul.mubr.bf16.gmra.mrb[0].mxu0 %v382
    %v728 = vpop.f32.mrb[0].mxu0
    %v729 = vadd.f32 0.0, %v728
    %v730 = vpop.f32.mrb[0].mxu0
    %v731 = vadd.f32 0.0, %v730
    %v732 = vpop.f32.mrb[0].mxu0
    %v733 = vadd.f32 0.0, %v732
    %v734 = vpop.f32.mrb[0].mxu0
    %v735 = vadd.f32 0.0, %v734
    %736 = vdwg.mxu0
    %v737 = vpack.c.bf16 %v423, %v419
    %v738 = vpack.c.bf16 %v433, %v429
    %v739 = vpack.c.bf16 %v443, %v439
    %v740 = vpack.c.bf16 %v453, %v449
    %v741 = vpack.c.bf16 %v463, %v459
    %v742 = vpack.c.bf16 %v473, %v469
    %v743 = vpack.c.bf16 %v483, %v479
    %v744 = vpack.c.bf16 %v493, %v489
    %v745 = vpack.c.bf16 %v503, %v499
    %v746 = vpack.c.bf16 %v513, %v509
    %v747 = vpack.c.bf16 %v523, %v519
    %v748 = vpack.c.bf16 %v533, %v529
    %v749 = vpack.c.bf16 %v543, %v539
    %v750 = vpack.c.bf16 %v553, %v549
    %v751 = vpack.c.bf16 %v563, %v559
    %v752 = vpack.c.bf16 %v573, %v569
    %v753 = vpack.c.bf16 %v583, %v579
    %v754 = vpack.c.bf16 %v593, %v589
    %v755 = vpack.c.bf16 %v603, %v599
    %v756 = vpack.c.bf16 %v613, %v609
    %v757 = vpack.c.bf16 %v623, %v619
    %v758 = vpack.c.bf16 %v633, %v629
    %v759 = vpack.c.bf16 %v643, %v639
    %v760 = vpack.c.bf16 %v653, %v649
    %v761 = vpack.c.bf16 %v663, %v659
    %v762 = vpack.c.bf16 %v673, %v669
    %v763 = vpack.c.bf16 %v683, %v679
    %v764 = vpack.c.bf16 %v693, %v689
    %v765 = vpack.c.bf16 %v703, %v699
    %v766 = vpack.c.bf16 %v713, %v709
    %v767 = vpack.c.bf16 %v723, %v719
    %v768 = vpack.c.bf16 %v733, %v729
    %v801 = vunpack.c.l.b16 %v737
    %v802 = vunpack.c.h.b16 %v737
    %v803 = vunpack.c.l.b16 %v738
    %v804 = vunpack.c.h.b16 %v738
    %v805 = vunpack.c.l.b16 %v739
    %v806 = vunpack.c.h.b16 %v739
    %v807 = vunpack.c.l.b16 %v740
    %v808 = vunpack.c.h.b16 %v740
    %v809 = vunpack.c.l.b16 %v741
    %v810 = vunpack.c.h.b16 %v741
    %v811 = vunpack.c.l.b16 %v742
    %v812 = vunpack.c.h.b16 %v742
    %v813 = vunpack.c.l.b16 %v743
    %v814 = vunpack.c.h.b16 %v743
    %v815 = vunpack.c.l.b16 %v744
    %v816 = vunpack.c.h.b16 %v744
    %v817 = vunpack.c.l.b16 %v745
    %v818 = vunpack.c.h.b16 %v745
    %v819 = vunpack.c.l.b16 %v746
    %v820 = vunpack.c.h.b16 %v746
    %v821 = vunpack.c.l.b16 %v747
    %v822 = vunpack.c.h.b16 %v747
    %v823 = vunpack.c.l.b16 %v748
    %v824 = vunpack.c.h.b16 %v748
    %v825 = vunpack.c.l.b16 %v749
    %v826 = vunpack.c.h.b16 %v749
    %v827 = vunpack.c.l.b16 %v750
    %v828 = vunpack.c.h.b16 %v750
    %v829 = vunpack.c.l.b16 %v751
    %v830 = vunpack.c.h.b16 %v751
    %v831 = vunpack.c.l.b16 %v752
    %v832 = vunpack.c.h.b16 %v752
    %v833 = vunpack.c.l.b16 %v753
    %v834 = vunpack.c.h.b16 %v753
    %v835 = vunpack.c.l.b16 %v754
    %v836 = vunpack.c.h.b16 %v754
    %v837 = vunpack.c.l.b16 %v755
    %v838 = vunpack.c.h.b16 %v755
    %v839 = vunpack.c.l.b16 %v756
    %v840 = vunpack.c.h.b16 %v756
    %v841 = vunpack.c.l.b16 %v757
    %v842 = vunpack.c.h.b16 %v757
    %v843 = vunpack.c.l.b16 %v758
    %v844 = vunpack.c.h.b16 %v758
    %v845 = vunpack.c.l.b16 %v759
    %v846 = vunpack.c.h.b16 %v759
    %v847 = vunpack.c.l.b16 %v760
    %v848 = vunpack.c.h.b16 %v760
    %v849 = vunpack.c.l.b16 %v761
    %v850 = vunpack.c.h.b16 %v761
    %v851 = vunpack.c.l.b16 %v762
    %v852 = vunpack.c.h.b16 %v762
    %v853 = vunpack.c.l.b16 %v763
    %v854 = vunpack.c.h.b16 %v763
    %v855 = vunpack.c.l.b16 %v764
    %v856 = vunpack.c.h.b16 %v764
    %v857 = vunpack.c.l.b16 %v765
    %v858 = vunpack.c.h.b16 %v765
    %v859 = vunpack.c.l.b16 %v766
    %v860 = vunpack.c.h.b16 %v766
    %v861 = vunpack.c.l.b16 %v767
    %v862 = vunpack.c.h.b16 %v767
    %v863 = vunpack.c.l.b16 %v768
    %v864 = vunpack.c.h.b16 %v768
    %v865 = vpack.c.b16 %v801, %v801
    %v866 = vpack.c.b16 %v802, %v802
    %v867 = vpack.c.b16 %v803, %v803
    %v868 = vpack.c.b16 %v804, %v804
    %v869 = vpack.c.b16 %v805, %v805
    %v870 = vpack.c.b16 %v806, %v806
    %v871 = vpack.c.b16 %v807, %v807
    %v872 = vpack.c.b16 %v808, %v808
    %v873 = vpack.c.b16 %v809, %v809
    %v874 = vpack.c.b16 %v810, %v810
    %v875 = vpack.c.b16 %v811, %v811
    %v876 = vpack.c.b16 %v812, %v812
    %v877 = vpack.c.b16 %v813, %v813
    %v878 = vpack.c.b16 %v814, %v814
    %v879 = vpack.c.b16 %v815, %v815
    %v880 = vpack.c.b16 %v816, %v816
    %v881 = vpack.c.b16 %v817, %v817
    %v882 = vpack.c.b16 %v818, %v818
    %v883 = vpack.c.b16 %v819, %v819
    %v884 = vpack.c.b16 %v820, %v820
    %v885 = vpack.c.b16 %v821, %v821
    %v886 = vpack.c.b16 %v822, %v822
    %v887 = vpack.c.b16 %v823, %v823
    %v888 = vpack.c.b16 %v824, %v824
    %v889 = vpack.c.b16 %v825, %v825
    %v890 = vpack.c.b16 %v826, %v826
    %v891 = vpack.c.b16 %v827, %v827
    %v892 = vpack.c.b16 %v828, %v828
    %v893 = vpack.c.b16 %v829, %v829
    %v894 = vpack.c.b16 %v830, %v830
    %v895 = vpack.c.b16 %v831, %v831
    %v896 = vpack.c.b16 %v832, %v832
    %v897 = vpack.c.b16 %v833, %v833
    %v898 = vpack.c.b16 %v834, %v834
    %v899 = vpack.c.b16 %v835, %v835
    %v900 = vpack.c.b16 %v836, %v836
    %v901 = vpack.c.b16 %v837, %v837
    %v902 = vpack.c.b16 %v838, %v838
    %v903 = vpack.c.b16 %v839, %v839
    %v904 = vpack.c.b16 %v840, %v840
    %v905 = vpack.c.b16 %v841, %v841
    %v906 = vpack.c.b16 %v842, %v842
    %v907 = vpack.c.b16 %v843, %v843
    %v908 = vpack.c.b16 %v844, %v844
    %v909 = vpack.c.b16 %v845, %v845
    %v910 = vpack.c.b16 %v846, %v846
    %v911 = vpack.c.b16 %v847, %v847
    %v912 = vpack.c.b16 %v848, %v848
    %v913 = vpack.c.b16 %v849, %v849
    %v914 = vpack.c.b16 %v850, %v850
    %v915 = vpack.c.b16 %v851, %v851
    %v916 = vpack.c.b16 %v852, %v852
    %v917 = vpack.c.b16 %v853, %v853
    %v918 = vpack.c.b16 %v854, %v854
    %v919 = vpack.c.b16 %v855, %v855
    %v920 = vpack.c.b16 %v856, %v856
    %v921 = vpack.c.b16 %v857, %v857
    %v922 = vpack.c.b16 %v858, %v858
    %v923 = vpack.c.b16 %v859, %v859
    %v924 = vpack.c.b16 %v860, %v860
    %v925 = vpack.c.b16 %v861, %v861
    %v926 = vpack.c.b16 %v862, %v862
    %v927 = vpack.c.b16 %v863, %v863
    %v928 = vpack.c.b16 %v864, %v864
    %993 = vst [vmem:[#allocation2] sm:$0xf] %v865
    %994 = vst [vmem:[#allocation2 + $0x4] sm:$0xf] %v866
    %995 = vst [vmem:[#allocation2 + $0x8] sm:$0xf] %v867
    %996 = vst [vmem:[#allocation2 + $0xc] sm:$0xf] %v868
    %997 = vst [vmem:[#allocation2 + $0x10] sm:$0xf] %v869
    %998 = vst [vmem:[#allocation2 + $0x14] sm:$0xf] %v870
    %999 = vst [vmem:[#allocation2 + $0x18] sm:$0xf] %v871
    %1000 = vst [vmem:[#allocation2 + $0x1c] sm:$0xf] %v872
    %1001 = vst [vmem:[#allocation2 + $0x20] sm:$0xf] %v873
    %1002 = vst [vmem:[#allocation2 + $0x24] sm:$0xf] %v874
    %1003 = vst [vmem:[#allocation2 + $0x28] sm:$0xf] %v875
    %1004 = vst [vmem:[#allocation2 + $0x2c] sm:$0xf] %v876
    %1005 = vst [vmem:[#allocation2 + $0x30] sm:$0xf] %v877
    %1006 = vst [vmem:[#allocation2 + $0x34] sm:$0xf] %v878
    %1007 = vst [vmem:[#allocation2 + $0x38] sm:$0xf] %v879
    %1008 = vst [vmem:[#allocation2 + $0x3c] sm:$0xf] %v880
    %1009 = vst [vmem:[#allocation2 + $0x40] sm:$0xf] %v881
    %1010 = vst [vmem:[#allocation2 + $0x44] sm:$0xf] %v882
    %1011 = vst [vmem:[#allocation2 + $0x48] sm:$0xf] %v883
    %1012 = vst [vmem:[#allocation2 + $0x4c] sm:$0xf] %v884
    %1013 = vst [vmem:[#allocation2 + $0x50] sm:$0xf] %v885
    %1014 = vst [vmem:[#allocation2 + $0x54] sm:$0xf] %v886
    %1015 = vst [vmem:[#allocation2 + $0x58] sm:$0xf] %v887
    %1016 = vst [vmem:[#allocation2 + $0x5c] sm:$0xf] %v888
    %1017 = vst [vmem:[#allocation2 + $0x60] sm:$0xf] %v889
    %1018 = vst [vmem:[#allocation2 + $0x64] sm:$0xf] %v890
    %1019 = vst [vmem:[#allocation2 + $0x68] sm:$0xf] %v891
    %1020 = vst [vmem:[#allocation2 + $0x6c] sm:$0xf] %v892
    %1021 = vst [vmem:[#allocation2 + $0x70] sm:$0xf] %v893
    %1022 = vst [vmem:[#allocation2 + $0x74] sm:$0xf] %v894
    %1023 = vst [vmem:[#allocation2 + $0x78] sm:$0xf] %v895
    %1024 = vst [vmem:[#allocation2 + $0x7c] sm:$0xf] %v896
    %1025 = vst [vmem:[#allocation2 + $0x80] sm:$0xf] %v897
    %1026 = vst [vmem:[#allocation2 + $0x84] sm:$0xf] %v898
    %1027 = vst [vmem:[#allocation2 + $0x88] sm:$0xf] %v899
    %1028 = vst [vmem:[#allocation2 + $0x8c] sm:$0xf] %v900
    %1029 = vst [vmem:[#allocation2 + $0x90] sm:$0xf] %v901
    %1030 = vst [vmem:[#allocation2 + $0x94] sm:$0xf] %v902
    %1031 = vst [vmem:[#allocation2 + $0x98] sm:$0xf] %v903
    %1032 = vst [vmem:[#allocation2 + $0x9c] sm:$0xf] %v904
    %1033 = vst [vmem:[#allocation2 + $0xa0] sm:$0xf] %v905
    %1034 = vst [vmem:[#allocation2 + $0xa4] sm:$0xf] %v906
    %1035 = vst [vmem:[#allocation2 + $0xa8] sm:$0xf] %v907
    %1036 = vst [vmem:[#allocation2 + $0xac] sm:$0xf] %v908
    %1037 = vst [vmem:[#allocation2 + $0xb0] sm:$0xf] %v909
    %1038 = vst [vmem:[#allocation2 + $0xb4] sm:$0xf] %v910
    %1039 = vst [vmem:[#allocation2 + $0xb8] sm:$0xf] %v911
    %1040 = vst [vmem:[#allocation2 + $0xbc] sm:$0xf] %v912
    %1041 = vst [vmem:[#allocation2 + $0xc0] sm:$0xf] %v913
    %1042 = vst [vmem:[#allocation2 + $0xc4] sm:$0xf] %v914
    %1043 = vst [vmem:[#allocation2 + $0xc8] sm:$0xf] %v915
    %1044 = vst [vmem:[#allocation2 + $0xcc] sm:$0xf] %v916
    %1045 = vst [vmem:[#allocation2 + $0xd0] sm:$0xf] %v917
    %1046 = vst [vmem:[#allocation2 + $0xd4] sm:$0xf] %v918
    %1047 = vst [vmem:[#allocation2 + $0xd8] sm:$0xf] %v919
    %1048 = vst [vmem:[#allocation2 + $0xdc] sm:$0xf] %v920
    %1049 = vst [vmem:[#allocation2 + $0xe0] sm:$0xf] %v921
    %1050 = vst [vmem:[#allocation2 + $0xe4] sm:$0xf] %v922
    %1051 = vst [vmem:[#allocation2 + $0xe8] sm:$0xf] %v923
    %1052 = vst [vmem:[#allocation2 + $0xec] sm:$0xf] %v924
    %1053 = vst [vmem:[#allocation2 + $0xf0] sm:$0xf] %v925
    %1054 = vst [vmem:[#allocation2 + $0xf4] sm:$0xf] %v926
    %1055 = vst [vmem:[#allocation2 + $0xf8] sm:$0xf] %v927
    %1056 = vst [vmem:[#allocation2 + $0xfc] sm:$0xf] %v928
    %vm1057 = vcmask 15360
    %1058 = vst.msk [vmem:[%s3] sm:$0xff] %vm1057, %v421
    %1059 = vst.msk [vmem:[%s3 + $0x8] sm:$0xff] %vm1057, %v425
    %1060 = vst.msk [vmem:[%s3 + $0x10] sm:$0xff] %vm1057, %v431
    %1061 = vst.msk [vmem:[%s3 + $0x18] sm:$0xff] %vm1057, %v435
    %1062 = vst.msk [vmem:[%s3 + $0x20] sm:$0xff] %vm1057, %v441
    %1063 = vst.msk [vmem:[%s3 + $0x28] sm:$0xff] %vm1057, %v445
    %1064 = vst.msk [vmem:[%s3 + $0x30] sm:$0xff] %vm1057, %v451
    %1065 = vst.msk [vmem:[%s3 + $0x38] sm:$0xff] %vm1057, %v455
    %1066 = vst.msk [vmem:[%s3 + $0x40] sm:$0xff] %vm1057, %v461
    %1067 = vst.msk [vmem:[%s3 + $0x48] sm:$0xff] %vm1057, %v465
    %1068 = vst.msk [vmem:[%s3 + $0x50] sm:$0xff] %vm1057, %v471
    %1069 = vst.msk [vmem:[%s3 + $0x58] sm:$0xff] %vm1057, %v475
    %1070 = vst.msk [vmem:[%s3 + $0x60] sm:$0xff] %vm1057, %v481
    %1071 = vst.msk [vmem:[%s3 + $0x68] sm:$0xff] %vm1057, %v485
    %1072 = vst.msk [vmem:[%s3 + $0x70] sm:$0xff] %vm1057, %v491
    %1073 = vst.msk [vmem:[%s3 + $0x78] sm:$0xff] %vm1057, %v495
    %1074 = vst.msk [vmem:[%s3 + $0x80] sm:$0xff] %vm1057, %v501
    %1075 = vst.msk [vmem:[%s3 + $0x88] sm:$0xff] %vm1057, %v505
    %1076 = vst.msk [vmem:[%s3 + $0x90] sm:$0xff] %vm1057, %v511
    %1077 = vst.msk [vmem:[%s3 + $0x98] sm:$0xff] %vm1057, %v515
    %1078 = vst.msk [vmem:[%s3 + $0xa0] sm:$0xff] %vm1057, %v521
    %1079 = vst.msk [vmem:[%s3 + $0xa8] sm:$0xff] %vm1057, %v525
    %1080 = vst.msk [vmem:[%s3 + $0xb0] sm:$0xff] %vm1057, %v531
    %1081 = vst.msk [vmem:[%s3 + $0xb8] sm:$0xff] %vm1057, %v535
    %1082 = vst.msk [vmem:[%s3 + $0xc0] sm:$0xff] %vm1057, %v541
    %1083 = vst.msk [vmem:[%s3 + $0xc8] sm:$0xff] %vm1057, %v545
    %1084 = vst.msk [vmem:[%s3 + $0xd0] sm:$0xff] %vm1057, %v551
    %1085 = vst.msk [vmem:[%s3 + $0xd8] sm:$0xff] %vm1057, %v555
    %1086 = vst.msk [vmem:[%s3 + $0xe0] sm:$0xff] %vm1057, %v561
    %1087 = vst.msk [vmem:[%s3 + $0xe8] sm:$0xff] %vm1057, %v565
    %1088 = vst.msk [vmem:[%s3 + $0xf0] sm:$0xff] %vm1057, %v571
    %1089 = vst.msk [vmem:[%s3 + $0xf8] sm:$0xff] %vm1057, %v575
    %1090 = vst.msk [vmem:[%s3 + $0x100] sm:$0xff] %vm1057, %v581
    %1091 = vst.msk [vmem:[%s3 + $0x108] sm:$0xff] %vm1057, %v585
    %1092 = vst.msk [vmem:[%s3 + $0x110] sm:$0xff] %vm1057, %v591
    %1093 = vst.msk [vmem:[%s3 + $0x118] sm:$0xff] %vm1057, %v595
    %1094 = vst.msk [vmem:[%s3 + $0x120] sm:$0xff] %vm1057, %v601
    %1095 = vst.msk [vmem:[%s3 + $0x128] sm:$0xff] %vm1057, %v605
    %1096 = vst.msk [vmem:[%s3 + $0x130] sm:$0xff] %vm1057, %v611
    %1097 = vst.msk [vmem:[%s3 + $0x138] sm:$0xff] %vm1057, %v615
    %1098 = vst.msk [vmem:[%s3 + $0x140] sm:$0xff] %vm1057, %v621
    %1099 = vst.msk [vmem:[%s3 + $0x148] sm:$0xff] %vm1057, %v625
    %1100 = vst.msk [vmem:[%s3 + $0x150] sm:$0xff] %vm1057, %v631
    %1101 = vst.msk [vmem:[%s3 + $0x158] sm:$0xff] %vm1057, %v635
    %1102 = vst.msk [vmem:[%s3 + $0x160] sm:$0xff] %vm1057, %v641
    %1103 = vst.msk [vmem:[%s3 + $0x168] sm:$0xff] %vm1057, %v645
    %1104 = vst.msk [vmem:[%s3 + $0x170] sm:$0xff] %vm1057, %v651
    %1105 = vst.msk [vmem:[%s3 + $0x178] sm:$0xff] %vm1057, %v655
    %1106 = vst.msk [vmem:[%s3 + $0x180] sm:$0xff] %vm1057, %v661
    %1107 = vst.msk [vmem:[%s3 + $0x188] sm:$0xff] %vm1057, %v665
    %1108 = vst.msk [vmem:[%s3 + $0x190] sm:$0xff] %vm1057, %v671
    %1109 = vst.msk [vmem:[%s3 + $0x198] sm:$0xff] %vm1057, %v675
    %1110 = vst.msk [vmem:[%s3 + $0x1a0] sm:$0xff] %vm1057, %v681
    %1111 = vst.msk [vmem:[%s3 + $0x1a8] sm:$0xff] %vm1057, %v685
    %1112 = vst.msk [vmem:[%s3 + $0x1b0] sm:$0xff] %vm1057, %v691
    %1113 = vst.msk [vmem:[%s3 + $0x1b8] sm:$0xff] %vm1057, %v695
    %1114 = vst.msk [vmem:[%s3 + $0x1c0] sm:$0xff] %vm1057, %v701
    %1115 = vst.msk [vmem:[%s3 + $0x1c8] sm:$0xff] %vm1057, %v705
    %1116 = vst.msk [vmem:[%s3 + $0x1d0] sm:$0xff] %vm1057, %v711
    %1117 = vst.msk [vmem:[%s3 + $0x1d8] sm:$0xff] %vm1057, %v715
    %1118 = vst.msk [vmem:[%s3 + $0x1e0] sm:$0xff] %vm1057, %v721
    %1119 = vst.msk [vmem:[%s3 + $0x1e8] sm:$0xff] %vm1057, %v725
    %1120 = vst.msk [vmem:[%s3 + $0x1f0] sm:$0xff] %vm1057, %v731
    %1121 = vst.msk [vmem:[%s3 + $0x1f8] sm:$0xff] %vm1057, %v735
    // Predicated region
    $region10: #{tpu_custom_call.1} parent=1 // pred_check
      _
    $region11: #{tpu_custom_call.1} parent=1 // pred_check_branch
      %1123 = sbr.rel (0) target = $region13
    $region12: #{tpu_custom_call.1} parent=1 // pred_region
      %s1125 = ssub.s32 4096, 4096
      %1126 = vsyncadd [#allocation3], %s1125
      %s1127 = sshll.u32 [#allocation2], 4
      %s1128 = int_to_ptr.vmem [resolvable:$true] %s1127
      %1133 = dma.vmem_to_hbm [thread:$0]  %s1128, 4096, %s2, [#allocation3], 64, 64, 4
    $region13: #{tpu_custom_call.1} parent=1 // pred_fallthru
      _
    // Predicated region
    $region14: #{tpu_custom_call.1} parent=1 // pred_check
      _
    $region15: #{tpu_custom_call.1} parent=1 // pred_check_branch
      %1135 = sbr.rel (0) target = $region17
    $region16: #{tpu_custom_call.1} parent=1 // pred_region
      _
    $region17: #{tpu_custom_call.1} parent=1 // pred_fallthru
      _
    // Predicated region
    $region18: #{tpu_custom_call.1} parent=1 // pred_check
      _
    $region19: #{tpu_custom_call.1} parent=1 // pred_check_branch
      %1137 = sbr.rel (0) target = $region21
    $region20: #{tpu_custom_call.1} parent=1 // pred_region
      %1138 = dma.done [#allocation3], 4096
    $region21: #{tpu_custom_call.1} parent=1 // pred_fallthru
      _
    // Predicated region
    $region22: #{tpu_custom_call.1} parent=1 // pred_check
      _
    $region23: #{tpu_custom_call.1} parent=1 // pred_check_branch
      %1140 = sbr.rel (0) target = $region25
    $region24: #{tpu_custom_call.1} parent=1 // pred_region
      _
    $region25: #{tpu_custom_call.1} parent=1 // pred_fallthru
      _
    %1141 = vsyncpa [#allocation3], 1

</llo_original>
